<compile_context>
chip_gen: v7x
topology: tpu7x:2x2x1
jax: 0.10.0
libtpu: 0.0.40
codegen_flags: <defaults>
</compile_context>

<pallas_src>
import jax
import jax.numpy as jnp
from jax.experimental import pallas as pl
from jax.experimental.pallas import tpu as pltpu


PATCH = 4
IN_C = 3
BACKBONE_C = 32
NUM_CLASSES = 1
NUM_ANCHORS = 1
HEAD_C = NUM_ANCHORS * (5 + NUM_CLASSES)     # = 6
HEAD_C_PAD = 8                               # sublane-aligned f32 store
K_IN = PATCH * PATCH * IN_C                  # = 48

# Max tokens per grid step.  Working set per step (double-buffered bf16 input
# tile + double-buffered f32 output tile) ~= 256 * tm bytes -> ~4 MiB at 16K.
TM_MAX = 16 * 1024


# ----------------------------------------------------------------------------
# Pallas kernel: one fused (backbone patch-embed o 1x1-conv head) matmul + bias
# ----------------------------------------------------------------------------
def _fused_head_kernel(xT_ref, w_ref, b_ref, oT_ref):
    """One lane-dense token tile.

    xT_ref: (K_IN, tm)          bf16  patchified tokens (transposed tile)
    w_ref:  (HEAD_C_PAD, K_IN)  bf16  fused (head @ patch-embed) weight, resident
    b_ref:  (HEAD_C_PAD, 1)     f32   fused bias, resident
    oT_ref: (HEAD_C_PAD, tm)    f32   lane-dense transposed head output
    """
    acc = jnp.dot(w_ref[...], xT_ref[...], preferred_element_type=jnp.float32)
    oT_ref[...] = (acc + b_ref[...]).astype(oT_ref.dtype)


def _fused_head_matmul(tokens_T, w_fused, b_fused, tm):
    """tokens_T: (K_IN, M_pad) bf16 -> (HEAD_C_PAD, M_pad) f32, one Pallas call."""
    Kin, M_pad = tokens_T.shape
    Co = w_fused.shape[0]
    assert M_pad % tm == 0

    bytes_accessed = (tokens_T.size * tokens_T.dtype.itemsize
                      + M_pad * Co * 4
                      + w_fused.size * w_fused.dtype.itemsize
                      + b_fused.size * b_fused.dtype.itemsize)
    cost = pl.CostEstimate(flops=2 * M_pad * Kin * Co, transcendentals=0,
                           bytes_accessed=bytes_accessed)

    return pl.pallas_call(
        _fused_head_kernel,
        out_shape=jax.ShapeDtypeStruct((Co, M_pad), jnp.float32),
        grid=(M_pad // tm,),
        in_specs=[
            pl.BlockSpec((Kin, tm), lambda i: (0, i)),   # streamed token tile
            pl.BlockSpec((Co, Kin), lambda i: (0, 0)),   # resident fused weight
            pl.BlockSpec((Co, 1), lambda i: (0, 0)),     # resident fused bias
        ],
        out_specs=pl.BlockSpec((Co, tm), lambda i: (0, i)),
        compiler_params=pltpu.CompilerParams(
            dimension_semantics=("parallel",)),
        cost_estimate=cost,
    )(tokens_T, w_fused, b_fused)


# ----------------------------------------------------------------------------
# Parameters + wrapper (plain JAX glue)
# ----------------------------------------------------------------------------
def init_params(key, compute_dtype=jnp.bfloat16):
    k1, k2, k3, k4 = jax.random.split(key, 4)
    # Stand-in backbone: Swin-style 4x4 / stride-4 patch embed.
    # K (=48) ordering is (c, ph, pw) to match the wrapper's NCHW patchify.
    w_pe = jax.random.normal(k1, (K_IN, BACKBONE_C), jnp.float32) * 0.02
    b_pe = jax.random.normal(k2, (BACKBONE_C,), jnp.float32) * 0.02
    # DetectionHead: 1x1 conv, BACKBONE_C -> HEAD_C.
    w_head = jax.random.normal(k3, (BACKBONE_C, HEAD_C), jnp.float32) * 0.02
    b_head = jax.random.normal(k4, (HEAD_C,), jnp.float32) * 0.02

    # Collapse the two linear maps (no nonlinearity in between):
    #   out = W_head^T (W_pe^T x + b_pe) + b_head
    #       = (W_head^T W_pe^T) x + (W_head^T b_pe + b_head)
    # TODO(synk): undo this fusion when real Swin blocks are inserted.
    w_fused = w_head.T @ w_pe.T                        # (HEAD_C, K_IN) f32
    b_fused = w_head.T @ b_pe + b_head                 # (HEAD_C,)      f32

    # Pad head channels 6 -> 8 so the f32 output store is sublane-aligned.
    w_fused = jnp.pad(w_fused, ((0, HEAD_C_PAD - HEAD_C), (0, 0)))
    b_fused = jnp.pad(b_fused, (0, HEAD_C_PAD - HEAD_C))

    return {
        "w_fused": w_fused.astype(compute_dtype),       # (8, 48) bf16
        "b_fused": b_fused.reshape(HEAD_C_PAD, 1),      # (8, 1)  f32
        # Unfused f32 copies, only used by the reference check in __main__.
        "ref_w_pe": w_pe, "ref_b_pe": b_pe,
        "ref_w_head": w_head, "ref_b_head": b_head,
    }


def _patchify_tokens_T(x_nchw, compute_dtype):
    """NCHW image -> (K_IN, B*Hf*Wf) token matrix in one fused convert+transpose.

    K ordering is (c, ph, pw); M ordering is (b, hf, wf).
    TODO(synk): fold this pass (and the tail padding) into the kernel's input
    DMA (memory_space=pl.ANY + make_async_copy of image row slabs) to remove
    the remaining wrapper HBM round trip.
    """
    B, C, H, W = x_nchw.shape
    Hf, Wf = H // PATCH, W // PATCH
    xr = x_nchw.astype(compute_dtype).reshape(B, C, Hf, PATCH, Wf, PATCH)
    tokens_T = jnp.transpose(xr, (1, 3, 5, 0, 2, 4)).reshape(K_IN, B * Hf * Wf)
    return tokens_T, B, Hf, Wf


@jax.jit
def yolo_swin_detector_forward(params, x_nchw):
    """Forward pass. x_nchw: (B, 3, H, W) f32 with H % 4 == W % 4 == 0.

    Returns (B, NUM_ANCHORS, 5+NUM_CLASSES, H/4, W/4) f32 -- same shape
    semantics as the PyTorch DetectionHead output (out.view(B, A, 5+C, H, W)).
    """
    tokens_T, B, Hf, Wf = _patchify_tokens_T(x_nchw, jnp.bfloat16)
    M = B * Hf * Wf

    # Tile selection: as few / as large lane-dense tiles as possible (per-step
    # Pallas overhead dominates at small tm), capped at TM_MAX so the working
    # set fits every generation's default scoped VMEM; >=2 steps for large M
    # so v7x megacore can split the "parallel" grid axis across its two TCs.
    steps = max(1, pl.cdiv(M, TM_MAX))
    if M >= 4096:
        steps = max(steps, 2)
    tm = max(128, pl.cdiv(pl.cdiv(M, steps), 128) * 128)
    M_pad = steps * tm
    if M_pad != M:
        tokens_T = jnp.pad(tokens_T, ((0, 0), (0, M_pad - M)))

    out_T = _fused_head_matmul(tokens_T, params["w_fused"], params["b_fused"],
                               tm)                       # (8, M_pad) f32
    out = out_T[:HEAD_C, :M].reshape(HEAD_C, B, Hf, Wf)
    out = jnp.transpose(out, (1, 0, 2, 3))               # (B, HEAD_C, Hf, Wf)
    return out.reshape(B, NUM_ANCHORS, 5 + NUM_CLASSES, Hf, Wf)


if __name__ == "__main__":
    key = jax.random.PRNGKey(0)
    pkey, xkey = jax.random.split(key)

    params = init_params(pkey)

    # Small NCHW RGB input consistent with the module (stride-4 patch embed).
    x = jax.random.normal(xkey, (2, IN_C, 16, 16), dtype=jnp.float32)

    out = jax.block_until_ready(yolo_swin_detector_forward(params, x))
    assert out.shape == (2, NUM_ANCHORS, 5 + NUM_CLASSES, 4, 4), out.shape
    assert out.dtype == jnp.float32

    # Reference 1: identical math (same bf16 casts, fused weights) in plain JAX.
    tok_T, B, Hf, Wf = _patchify_tokens_T(x, jnp.bfloat16)
    ref_T = jnp.dot(params["w_fused"], tok_T,
                    preferred_element_type=jnp.float32) + params["b_fused"]
    ref = ref_T[:HEAD_C].reshape(HEAD_C, B, Hf, Wf).transpose(1, 0, 2, 3)
    ref = ref.reshape(B, NUM_ANCHORS, 5 + NUM_CLASSES, Hf, Wf)
    err1 = float(jnp.max(jnp.abs(out - ref)))
    assert jnp.allclose(out, ref, atol=1e-4, rtol=1e-3), err1

    # Reference 2: unfused fp32 backbone-then-head math (validates the weight
    # fusion algebra; looser tolerance covers bf16 rounding of tokens/weights).
    tok_f32, _, _, _ = _patchify_tokens_T(x, jnp.float32)
    feats = params["ref_w_pe"].T @ tok_f32 + params["ref_b_pe"][:, None]
    head = params["ref_w_head"].T @ feats + params["ref_b_head"][:, None]
    ref2 = head.reshape(HEAD_C, B, Hf, Wf).transpose(1, 0, 2, 3)
    ref2 = ref2.reshape(B, NUM_ANCHORS, 5 + NUM_CLASSES, Hf, Wf)
    err2 = float(jnp.max(jnp.abs(out - ref2)))
    assert jnp.allclose(out, ref2, atol=5e-3, rtol=5e-2), err2

    print("KERNEL_OK")
</pallas_src>

<mosaic_0001>
module attributes {stable_mosaic.version = 11 : i64} {
  func.func @_fused_head_kernel(%arg0: i32, %arg1: memref<48x128xbf16, #tpu.memory_space<vmem>>, %arg2: memref<8x48xbf16, #tpu.memory_space<vmem>>, %arg3: memref<8x1xf32, #tpu.memory_space<vmem>>, %arg4: memref<8x128xf32, #tpu.memory_space<vmem>>) attributes {dimension_semantics = [#tpu.dimension_semantics<parallel>], iteration_bounds = array<i64: 1>, scalar_prefetch = 0 : i64, scratch_operands = 0 : i64, tpu.core_type = #tpu.core_type<tc>, window_params = [{transform_indices = @transform_0, window_bounds = array<i64: 48, 128>}, {pipeline_mode = #tpu.pipeline_mode<synchronous>, transform_indices = @transform_1, window_bounds = array<i64: 8, 48>}, {pipeline_mode = #tpu.pipeline_mode<synchronous>, transform_indices = @transform_2, window_bounds = array<i64: 8, 1>}, {transform_indices = @transform_3, window_bounds = array<i64: 8, 128>}]} {
    %c0 = arith.constant 0 : index
    %c0_0 = arith.constant 0 : index
    %0 = vector.load %arg2[%c0, %c0_0] : memref<8x48xbf16, #tpu.memory_space<vmem>>, vector<8x48xbf16>
    %c0_1 = arith.constant 0 : index
    %c0_2 = arith.constant 0 : index
    %1 = vector.load %arg1[%c0_1, %c0_2] : memref<48x128xbf16, #tpu.memory_space<vmem>>, vector<48x128xbf16>
    %cst = arith.constant dense<0.000000e+00> : vector<8x128xf32>
    %2 = tpu.matmul %0, %1, %cst {dimension_numbers = #tpu.dot_dimension_numbers<[1], [0], [0], [1], [0, 0, 1, 1], [], []>} : vector<8x48xbf16>, vector<48x128xbf16>, vector<8x128xf32> -> vector<8x128xf32>
    %c0_3 = arith.constant 0 : index
    %c0_4 = arith.constant 0 : index
    %3 = vector.load %arg3[%c0_3, %c0_4] : memref<8x1xf32, #tpu.memory_space<vmem>>, vector<8x1xf32>
    %4 = vector.broadcast %3 : vector<8x1xf32> to vector<8x128xf32>
    %5 = arith.addf %2, %4 : vector<8x128xf32>
    %c0_5 = arith.constant 0 : index
    %c0_6 = arith.constant 0 : index
    %6 = vector.load %arg4[%c0_5, %c0_6] : memref<8x128xf32, #tpu.memory_space<vmem>>, vector<8x128xf32>
    tpu.vector_store %arg4[%c0_5, %c0_6], %5 {strides = array<i32>} : memref<8x128xf32, #tpu.memory_space<vmem>>, vector<8x128xf32>,
    return
  }
  func.func @transform_0(%arg0: i32) -> (i32, i32) {
    %c0_i32 = arith.constant 0 : i32
    %c0_i32_0 = arith.constant 0 : i32
    return %c0_i32, %arg0 : i32, i32
  }
  func.func @transform_1(%arg0: i32) -> (i32, i32) {
    %c0_i32 = arith.constant 0 : i32
    %c0_i32_0 = arith.constant 0 : i32
    %c0_i32_1 = arith.constant 0 : i32
    return %c0_i32, %c0_i32_0 : i32, i32
  }
  func.func @transform_2(%arg0: i32) -> (i32, i32) {
    %c0_i32 = arith.constant 0 : i32
    %c0_i32_0 = arith.constant 0 : i32
    %c0_i32_1 = arith.constant 0 : i32
    return %c0_i32, %c0_i32_0 : i32, i32
  }
  func.func @transform_3(%arg0: i32) -> (i32, i32) {
    %c0_i32 = arith.constant 0 : i32
    %c0_i32_0 = arith.constant 0 : i32
    return %c0_i32, %arg0 : i32, i32
  }
}

</mosaic_0001>

<llo_original>
// kernel: yolo_swin_detector_forward.1
$region0: #{yolo_swin_detector_forward.1}
  #allocation0 [shape = 'u32[]', space=smem, size = 0x4, offset = 0x4, fixed_abs, tag = 'smem constant byte address 0x4 - core index']
  #allocation1 [shape = 'u32[144,128]{1,0:T(1,128)}', space=vmem, size = 0x12000, scoped, tag = 'internal scratch']
  %s0 = inlined_call_operand.vmem [shape: bf16[48,128], index: 0, kind: input, shape index: {}]
  %s1 = inlined_call_operand.vmem [shape: bf16[8,48], index: 1, kind: input, shape index: {}]
  %s2 = inlined_call_operand.vmem [shape: f32[8,1], index: 2, kind: input, shape index: {}]
  %s3 = inlined_call_operand.vmem [shape: f32[8,128], index: 3, kind: output, shape index: {}]
  %s4 = sld [smem:[#allocation0]]
  $region22: #{yolo_swin_detector_forward.1} parent=0
    _
  %s6 = ssub.s32 1, %s4
  %s7 = scalar_select 0, %s6, %s4
  // Predicated region
  $region2: #{yolo_swin_detector_forward.1} parent=0 // pred_check
    _
  $region3: #{yolo_swin_detector_forward.1} parent=0 // pred_check_branch
    %9 = sbr.rel (0) target = $region5
  $region4: #{yolo_swin_detector_forward.1} parent=0 // pred_region
    _
  $region5: #{yolo_swin_detector_forward.1} parent=0 // pred_fallthru
    _
  // Predicated region
  $region6: #{yolo_swin_detector_forward.1} parent=0 // pred_check
    _
  $region7: #{yolo_swin_detector_forward.1} parent=0 // pred_check_branch
    %11 = sbr.rel (0) target = $region9
  $region8: #{yolo_swin_detector_forward.1} parent=0 // pred_region
    _
  $region9: #{yolo_swin_detector_forward.1} parent=0 // pred_fallthru
    _
  // Predicated region
  $region10: #{yolo_swin_detector_forward.1} parent=0 // pred_check
    _
  $region11: #{yolo_swin_detector_forward.1} parent=0 // pred_check_branch
    %13 = sbr.rel (0) target = $region13
  $region12: #{yolo_swin_detector_forward.1} parent=0 // pred_region
    _
  $region13: #{yolo_swin_detector_forward.1} parent=0 // pred_fallthru
    _
  %v15 = vld [vmem:[%s1] sm:$0xf]
  %v16 = vld [vmem:[%s0] sm:$0xf]
  %v17 = vld [vmem:[%s0 + $0x4] sm:$0xf]
  %v18 = vld [vmem:[%s0 + $0x8] sm:$0xf]
  %v19 = vld [vmem:[%s0 + $0xc] sm:$0xf]
  %v20 = vld [vmem:[%s0 + $0x10] sm:$0xf]
  %v21 = vld [vmem:[%s0 + $0x14] sm:$0xf]
  %v22 = vld [vmem:[%s2] sm:$0xff]
  %24 = vset.pattern.permute.xlu0 0
  %25 = vperm.xlu0 %24, %v22
  %v26 = vpop.permute.xlu0 %25
  %v34 = vunpack.c.l.b16 %v16
  %v35 = vunpack.c.l.b16 %v17
  %v36 = vunpack.c.l.b16 %v18
  %v37 = vunpack.c.l.b16 %v19
  %v38 = vunpack.c.l.b16 %v20
  %v39 = vunpack.c.l.b16 %v21
  %v40 = vpack.c.b16 %v35, %v34
  %v41 = vpack.c.b16 %v37, %v36
  %v42 = vpack.c.b16 %v39, %v38
  %vm46 = vcmask 392192
  %v48 = vsel %vm46, %v15, 0
  %50 = vmatprep.subr.bf16.mxu0 0
  %51 = vmatpush1.bf16.msra.mxu0 %v40
  %52 = vmatprep.subr.bf16.mxu0 0
  %53 = vmatpush1.bf16.msra.mxu0 %v41
  %54 = vmatprep.subr.bf16.mxu0 0
  %55 = vmatpush1.bf16.msra.mxu0 %v42
  %56 = vmatprep.subr.bf16.mxu0 0
  %57 = vmatpush1.bf16.msra.mxu0 0
  %58 = vmatprep.subr.bf16.mxu0 0
  %59 = vmatpush1.bf16.msra.mxu0 0
  %60 = vmatprep.subr.bf16.mxu0 0
  %61 = vmatpush1.bf16.msra.mxu0 0
  %62 = vmatprep.subr.bf16.mxu0 0
  %63 = vmatpush1.bf16.msra.mxu0 0
  %64 = vmatprep.subr.bf16.mxu0 0
  %65 = vmatpush1.bf16.msra.mxu0 0
  %66 = vmatprep.subr.bf16.mxu0 0
  %67 = vmatpush1.bf16.msra.mxu0 0
  %68 = vmatprep.subr.bf16.mxu0 0
  %69 = vmatpush1.bf16.msra.mxu0 0
  %70 = vmatprep.subr.bf16.mxu0 0
  %71 = vmatpush1.bf16.msra.mxu0 0
  %72 = vmatprep.subr.bf16.mxu0 0
  %73 = vmatpush1.bf16.msra.mxu0 0
  %74 = vmatprep.subr.bf16.mxu0 0
  %75 = vmatpush1.bf16.msra.mxu0 0
  %76 = vmatprep.subr.bf16.mxu0 0
  %77 = vmatpush1.bf16.msra.mxu0 0
  %78 = vmatprep.subr.bf16.mxu0 0
  %79 = vmatpush1.bf16.msra.mxu0 0
  %80 = vmatprep.subr.bf16.mxu0 0
  %81 = vmatpush1.bf16.msra.mxu0 0
  %82 = vmatprep.mubr.bf16.mxu0 0
  %83 = vmatmul.mubr.bf16.gmra.mrb[0].mxu0 %v48
  %v84 = vpop.f32.mrb[0].mxu0
  %v85 = vadd.f32 %v26, %v84
  %v86 = vpop.f32.mrb[0].mxu0
  %v87 = vpop.f32.mrb[0].mxu0
  %v88 = vpop.f32.mrb[0].mxu0
  %89 = vdwg.mxu0
  %90 = vst [vmem:[%s3] sm:$0xff] %v85
  // Predicated region
  $region14: #{yolo_swin_detector_forward.1} parent=0 // pred_check
    _
  $region15: #{yolo_swin_detector_forward.1} parent=0 // pred_check_branch
    %92 = sbr.rel (0) target = $region17
  $region16: #{yolo_swin_detector_forward.1} parent=0 // pred_region
    _
  $region17: #{yolo_swin_detector_forward.1} parent=0 // pred_fallthru
    _
  // Predicated region
  $region18: #{yolo_swin_detector_forward.1} parent=0 // pred_check
    _
  $region19: #{yolo_swin_detector_forward.1} parent=0 // pred_check_branch
    %94 = sbr.rel (0) target = $region21
  $region20: #{yolo_swin_detector_forward.1} parent=0 // pred_region
    _
  $region21: #{yolo_swin_detector_forward.1} parent=0 // pred_fallthru
    _

</llo_original>
